<compile_context>
chip_gen: v7x
topology: tpu7x:2x2x1
jax: 0.10.0
libtpu: 0.0.40
codegen_flags: <defaults>
</compile_context>

<pallas_src>
import functools
import math

import jax
import jax.numpy as jnp
from jax import lax
from jax.experimental import pallas as pl
from jax.experimental.pallas import tpu as pltpu

_MAX_TILE_ROWS = 2048        # max output rows per grid step
_SINGLE_STEP_ROWS = 1024     # tables at or below this run in a single grid step
_MAX_BLOCK_BYTES = 2 * 1024 * 1024   # per-block VMEM cap (x2 for double buffering)


def _round_up(x, m):
    return ((x + m - 1) // m) * m


def _pick_tile(rows, width):
    """rows: output slab rows (multiple of 8); width: output lane count.

    Returns (tile, grid).  Keeps each output block <= _MAX_BLOCK_BYTES and, for
    larger tables, uses >= 2 grid steps so the "parallel" grid axis can shard
    across v7x's two TensorCores.
    """
    by_bytes = max(8, (_MAX_BLOCK_BYTES // (width * 4)) // 8 * 8)
    cap = min(_MAX_TILE_ROWS, by_bytes)
    if rows <= min(_SINGLE_STEP_ROWS, cap):
        return rows, 1
    tile = min(cap, _round_up(pl.cdiv(rows, 2), 8))
    return tile, pl.cdiv(rows, tile)


# ----------------------------------------------------------------------------- kernels


def _rope_seq_kernel(a_ref, b_ref, o_ref, *, tile, pack):
    """Consecutive positions generated in-kernel; single cos over lane-phased angles.

    a_ref: (1, W) inv_freq replicated per lane; b_ref: (1, W) = off*inv + phase.
    Output lane l of slab row r holds cos((pack*r + l//w) * inv[j] + phase[k]).
    """
    row0 = pl.program_id(0) * tile
    pos = (pack * (row0 + lax.broadcasted_iota(jnp.int32, (tile, 1), 0))).astype(jnp.float32)
    o_ref[...] = jnp.cos(pos * a_ref[...] + b_ref[...])


def _rope_tok_kernel(pos_ref, a_ref, b_ref, o_ref):
    """Arbitrary token positions: pos_ref (tile, 1) f32; single cos per element."""
    o_ref[...] = jnp.cos(pos_ref[...] * a_ref[...] + b_ref[...])


# ----------------------------------------------------------------------------- pallas wrappers


@functools.partial(jax.jit, static_argnums=(2, 3, 4, 5))
def _rope_table_seq(a4, b4, rows, tile, grid, pack):
    w = a4.shape[1]
    return pl.pallas_call(
        functools.partial(_rope_seq_kernel, tile=tile, pack=pack),
        out_shape=jax.ShapeDtypeStruct((rows, w), jnp.float32),
        grid_spec=pltpu.PrefetchScalarGridSpec(
            num_scalar_prefetch=0,
            grid=(grid,),
            in_specs=[
                pl.BlockSpec((1, w), lambda i: (0, 0)),
                pl.BlockSpec((1, w), lambda i: (0, 0)),
            ],
            out_specs=pl.BlockSpec((tile, w), lambda i: (i, 0)),
        ),
        compiler_params=pltpu.CompilerParams(
            dimension_semantics=("parallel",)),
    )(a4, b4)


@functools.partial(jax.jit, static_argnums=(3, 4, 5))
def _rope_table_tok(pos2d, a4, b4, rows, tile, grid):
    w = a4.shape[1]
    return pl.pallas_call(
        _rope_tok_kernel,
        out_shape=jax.ShapeDtypeStruct((rows, w), jnp.float32),
        grid_spec=pltpu.PrefetchScalarGridSpec(
            num_scalar_prefetch=0,
            grid=(grid,),
            in_specs=[
                pl.BlockSpec((tile, 1), lambda i: (i, 0)),
                pl.BlockSpec((1, w), lambda i: (0, 0)),
                pl.BlockSpec((1, w), lambda i: (0, 0)),
            ],
            out_specs=pl.BlockSpec((tile, w), lambda i: (i, 0)),
        ),
        compiler_params=pltpu.CompilerParams(
            dimension_semantics=("parallel",)),
    )(pos2d, a4, b4)


# ----------------------------------------------------------------------------- module


class RopePositionEmbedding:
    """JAX/Pallas port of the PyTorch RopePositionEmbedding module."""

    def __init__(self, hidden_dim, max_positions, base):
        assert hidden_dim % 2 == 0
        self.theta = float(base)
        self.head_dim = hidden_dim
        self.max_seqlen = max_positions

        halfdim = hidden_dim // 2
        w = 4 * halfdim                     # flat lane width of one position's 2x2 slabs
        # For head_dim < 64 the natural lane width is < 128 -> masked partial stores.
        # The seqlen path packs `pack` consecutive positions per output row instead.
        pack = 1 if w >= 128 else -(-128 // w)

        self.halfdim = halfdim
        self.w = w
        self.pack = pack

        # inv_freq exactly as the reference (f32 pow).
        inv = (1.0 / self.theta
               ** (jnp.arange(0, hidden_dim, 2, dtype=jnp.float32)[:halfdim] / hidden_dim))
        self._a_tok, self._b_tok = self._make_lane_consts(inv, 1)
        if pack == 1:
            self._a_seq, self._b_seq = self._a_tok, self._b_tok
        else:
            self._a_seq, self._b_seq = self._make_lane_consts(inv, pack)

    @staticmethod
    def _make_lane_consts(inv, pack):
        """Per-lane constants so the kernel is a single fused mul-add-cos.

        For output lane l (freq j = (l % w)//4, 2x2 slot k = l % 4, packed position
        offset d = l // w):
            out[l] = cos((pack*row + d) * inv[j] + phase[k]),
            phase  = [0, +pi/2, -pi/2, 0]  ->  [cos, -sin, sin, cos].
        """
        halfdim = inv.shape[0]
        w = 4 * halfdim
        width = pack * w
        lane = jnp.arange(width)
        inv_lane = inv[(lane % w) // 4]
        phase = jnp.array([0.0, math.pi / 2, -math.pi / 2, 0.0], jnp.float32)[lane % 4]
        off = (lane // w).astype(jnp.float32)
        a = inv_lane.reshape(1, width).astype(jnp.float32)
        b = (off * inv_lane + phase).reshape(1, width).astype(jnp.float32)
        return a, b

    def _seq(self, seqlen):
        seqlen = int(seqlen)
        p, w = self.pack, self.w
        pos_pad = max(8 * p, _round_up(seqlen, 8 * p))
        rows = pos_pad // p                                  # slab rows (multiple of 8)
        tile, grid = _pick_tile(rows, p * w)
        slab = _rope_table_seq(self._a_seq, self._b_seq, rows, tile, grid, p)
        table = slab.reshape(pos_pad, w)                     # free contiguous regroup
        if pos_pad != seqlen:
            table = table[:seqlen]
        return table.reshape(seqlen, self.halfdim, 2, 2)

    def _gather(self, positions_1d):
        # NOTE: positions cast to f32 (matches the PyTorch f32 precompute); indices > 2**24
        # lose integer precision, same as the reference.
        # TODO(synk): for head_dim < 64 the gather path's output lane width is < 128
        # (masked vst); lane-packing it like the seqlen path needs per-lane position gathers.
        n = positions_1d.shape[0]
        rows = max(8, _round_up(n, 8))
        tile, grid = _pick_tile(rows, self.w)
        in_rows = grid * tile
        pos = positions_1d.astype(jnp.float32).reshape(n, 1)
        if in_rows != n:
            pos = jnp.pad(pos, ((0, in_rows - n), (0, 0)))
        slab = _rope_table_tok(pos, self._a_tok, self._b_tok, rows, tile, grid)
        out = slab if rows == n else slab[:n]
        return out.reshape(n, self.halfdim, 2, 2)

    def __call__(self, seqlen=None, token_idx=None):
        assert seqlen is not None or token_idx is not None, \
            'Should provide atleast seqlen or tok_idx'
        if token_idx is not None:
            token_idx = jnp.asarray(token_idx)
            lead_shape = token_idx.shape
            out = self._gather(token_idx.reshape(-1))
            return out.reshape(*lead_shape, self.head_dim // 2, 2, 2)
        return self._seq(int(seqlen))


# ----------------------------------------------------------------------------- self-test


def _reference_freqs_cis(dim, positions, theta):
    """Pure-JAX mirror of the torch precompute (correctness check only)."""
    halfdim = dim // 2
    inv = 1.0 / theta ** (jnp.arange(0, dim, 2, dtype=jnp.float32)[:halfdim] / dim)
    ang = positions.astype(jnp.float32)[:, None] * inv[None, :]
    c, s = jnp.cos(ang), jnp.sin(ang)
    return jnp.stack([c, -s, s, c], axis=-1).reshape(positions.shape[0], halfdim, 2, 2)


def _tol(max_pos):
    # The single-cos phase formulation deviates from the reference's sin path by up to
    # ~|angle| * 2^-24 (f32 rounding of angle + pi/2); angle <= max position since inv <= 1.
    return 2e-5 + 3e-7 * float(max_pos)


if __name__ == "__main__":
    hidden_dim = 32          # head_dim (exercises the pack=2 lane-dense seqlen path)
    max_positions = 64
    base = 10000.0
    seqlen = 8

    rope = RopePositionEmbedding(hidden_dim, max_positions, base)

    # Case 1: consecutive positions.
    out_seq = jax.block_until_ready(rope(seqlen=seqlen))
    assert out_seq.shape == (seqlen, hidden_dim // 2, 2, 2)
    assert out_seq.dtype == jnp.float32
    ref_seq = _reference_freqs_cis(hidden_dim, jnp.arange(seqlen), base)
    assert jnp.allclose(out_seq, ref_seq, rtol=0.0, atol=_tol(seqlen - 1))

    # Case 2: arbitrary token indices (gather semantics).
    key = jax.random.PRNGKey(0)
    token_idx = jax.random.randint(key, (2, 8), 0, max_positions, dtype=jnp.int32)
    out_tok = jax.block_until_ready(rope(token_idx=token_idx))
    assert out_tok.shape == (2, 8, hidden_dim // 2, 2, 2)
    ref_tok = _reference_freqs_cis(hidden_dim, token_idx.reshape(-1), base).reshape(
        2, 8, hidden_dim // 2, 2, 2)
    assert jnp.allclose(out_tok, ref_tok, rtol=0.0, atol=_tol(max_positions - 1))

    # Case 2b: gather with length not a multiple of 8 (exercises jnp.pad + partial out block).
    tok5 = jnp.array([0, 3, 17, 42, 63], dtype=jnp.int32)
    out5 = jax.block_until_ready(rope(token_idx=tok5))
    ref5 = _reference_freqs_cis(hidden_dim, tok5, base)
    assert out5.shape == (5, hidden_dim // 2, 2, 2)
    assert jnp.allclose(out5, ref5, rtol=0.0, atol=_tol(max_positions - 1))

    # Case 3: larger table, head_dim=128 (pack=1, multi-step grid, non-8-aligned seqlen).
    rope_big = RopePositionEmbedding(128, 2048, base)
    out_big = jax.block_until_ready(rope_big(seqlen=1500))
    assert out_big.shape == (1500, 64, 2, 2)
    ref_big = _reference_freqs_cis(128, jnp.arange(1500), base)
    assert jnp.allclose(out_big, ref_big, rtol=0.0, atol=_tol(1499))

    print("KERNEL_OK")
</pallas_src>

<mosaic_0001>
module attributes {stable_mosaic.version = 11 : i64} {
  func.func @_rope_seq_kernel(%arg0: i32, %arg1: memref<1x128xf32, #tpu.memory_space<vmem>>, %arg2: memref<1x128xf32, #tpu.memory_space<vmem>>, %arg3: memref<8x128xf32, #tpu.memory_space<vmem>>) attributes {dimension_semantics = [#tpu.dimension_semantics<parallel>], iteration_bounds = array<i64: 1>, scalar_prefetch = 0 : i64, scratch_operands = 0 : i64, tpu.core_type = #tpu.core_type<tc>, window_params = [{pipeline_mode = #tpu.pipeline_mode<synchronous>, transform_indices = @transform_0, window_bounds = array<i64: 1, 128>}, {pipeline_mode = #tpu.pipeline_mode<synchronous>, transform_indices = @transform_1, window_bounds = array<i64: 1, 128>}, {transform_indices = @transform_2, window_bounds = array<i64: 8, 128>}]} {
    %c8_i32 = arith.constant 8 : i32
    %0 = arith.muli %arg0, %c8_i32 : i32
    %1 = tpu.iota {dimensions = array<i32: 0>} : vector<8x1xi32>
    %2 = vector.broadcast %0 : i32 to vector<8x1xi32>
    %3 = arith.addi %2, %1 : vector<8x1xi32>
    %c2_i32 = arith.constant 2 : i32
    %4 = vector.broadcast %c2_i32 : i32 to vector<8x1xi32>
    %5 = arith.muli %4, %3 : vector<8x1xi32>
    %6 = arith.sitofp %5 : vector<8x1xi32> to vector<8x1xf32>
    %c0 = arith.constant 0 : index
    %c0_0 = arith.constant 0 : index
    %7 = vector.load %arg1[%c0, %c0_0] : memref<1x128xf32, #tpu.memory_space<vmem>>, vector<1x128xf32>
    %8 = vector.broadcast %6 : vector<8x1xf32> to vector<8x128xf32>
    %9 = vector.broadcast %7 : vector<1x128xf32> to vector<8x128xf32>
    %10 = arith.mulf %8, %9 : vector<8x128xf32>
    %c0_1 = arith.constant 0 : index
    %c0_2 = arith.constant 0 : index
    %11 = vector.load %arg2[%c0_1, %c0_2] : memref<1x128xf32, #tpu.memory_space<vmem>>, vector<1x128xf32>
    %12 = vector.broadcast %11 : vector<1x128xf32> to vector<8x128xf32>
    %13 = arith.addf %10, %12 : vector<8x128xf32>
    %14 = math.cos %13 : vector<8x128xf32>
    %c0_3 = arith.constant 0 : index
    %c0_4 = arith.constant 0 : index
    %15 = vector.load %arg3[%c0_3, %c0_4] : memref<8x128xf32, #tpu.memory_space<vmem>>, vector<8x128xf32>
    tpu.vector_store %arg3[%c0_3, %c0_4], %14 {strides = array<i32>} : memref<8x128xf32, #tpu.memory_space<vmem>>, vector<8x128xf32>,
    return
  }
  func.func @transform_0(%arg0: i32) -> (i32, i32) {
    %c0_i32 = arith.constant 0 : i32
    %c0_i32_0 = arith.constant 0 : i32
    %c0_i32_1 = arith.constant 0 : i32
    return %c0_i32, %c0_i32_0 : i32, i32
  }
  func.func @transform_1(%arg0: i32) -> (i32, i32) {
    %c0_i32 = arith.constant 0 : i32
    %c0_i32_0 = arith.constant 0 : i32
    %c0_i32_1 = arith.constant 0 : i32
    return %c0_i32, %c0_i32_0 : i32, i32
  }
  func.func @transform_2(%arg0: i32) -> (i32, i32) {
    %c0_i32 = arith.constant 0 : i32
    %c0_i32_0 = arith.constant 0 : i32
    return %arg0, %c0_i32 : i32, i32
  }
}

</mosaic_0001>

<llo_original>
// kernel: _rope_table_seq.1
$region0: #{_rope_table_seq.1}
  #allocation0 [shape = 'u32[]', space=smem, size = 0x4, offset = 0x4, fixed_abs, tag = 'smem constant byte address 0x4 - core index']
  #allocation1 [shape = 'u32[144,128]{1,0:T(1,128)}', space=vmem, size = 0x12000, scoped, tag = 'internal scratch']
  %s0 = inlined_call_operand.hbm [shape: f32[1,128], index: 0, kind: input, shape index: {}]
  %s1 = inlined_call_operand.vmem [shape: f32[1,128], index: 1, kind: input, shape index: {}]
  %s2 = inlined_call_operand.hbm [shape: f32[8,128], index: 2, kind: output, shape index: {}]
  %s3 = sld [smem:[#allocation0]]
  $region22: #{_rope_table_seq.1} parent=0
    _
  %s5 = ssub.s32 1, %s3
  %s6 = scalar_select 0, %s5, %s3
  $region1: #{_rope_table_seq.1} parent=0
    #allocation2 [shape = 'u8[512]{0}', space=vmem, size = 0x400, scoped, tag = 'input window, operand 0, single buffered']
    #allocation3 [shape = 's32[1]{0}', space=sflag, size = 0x4, scoped, tag = 'scoped memory for _rope_table_seq.1']
    #allocation4 [shape = 's32[1]{0}', space=sflag, size = 0x4, scoped, tag = 'scoped memory for _rope_table_seq.1']
    #allocation5 [shape = 'u8[4096]{0}', space=vmem, size = 0x1000, scoped, tag = 'output window, operand 0, single buffered']
    %7 = vsyncpa [#allocation3], 0
    %8 = vsyncpa [#allocation4], 0
    // Predicated region
    $region2: #{_rope_table_seq.1} parent=1 // pred_check
      _
    $region3: #{_rope_table_seq.1} parent=1 // pred_check_branch
      %10 = sbr.rel (0) target = $region5
    $region4: #{_rope_table_seq.1} parent=1 // pred_region
      %s12 = ssub.s32 16, 16
      %13 = vsyncadd [#allocation3], %s12
      %s15 = sshll.u32 [#allocation2], 4
      %s16 = int_to_ptr.vmem [resolvable:$true] %s15
      %18 = dma.hbm_to_vmem [thread:$0]  %s0, 16, %s16, [#allocation3]
    $region5: #{_rope_table_seq.1} parent=1 // pred_fallthru
      _
    // Predicated region
    $region6: #{_rope_table_seq.1} parent=1 // pred_check
      _
    $region7: #{_rope_table_seq.1} parent=1 // pred_check_branch
      %20 = sbr.rel (0) target = $region9
    $region8: #{_rope_table_seq.1} parent=1 // pred_region
      _
    $region9: #{_rope_table_seq.1} parent=1 // pred_fallthru
      _
    // Predicated region
    $region10: #{_rope_table_seq.1} parent=1 // pred_check
      _
    $region11: #{_rope_table_seq.1} parent=1 // pred_check_branch
      %22 = sbr.rel (0) target = $region13
    $region12: #{_rope_table_seq.1} parent=1 // pred_region
      %23 = dma.done [#allocation3], 16
    $region13: #{_rope_table_seq.1} parent=1 // pred_fallthru
      _
    %s24 = smul.u32 0, 8
    %v25 = vlaneseq
    %v26 = vshrl.u32 %v25, 7
    %v27 = vstv %s24
    %v28 = vadd.s32 %v27, %v26
    %v29 = vmul.u32 %v28, 2
    %v30 = vcvt.s32.f32 %v29
    %v31 = vld [vmem:[#allocation2] sm:$0x1]
    %v33 = vlaneseq
    %v34 = vshrl.u32 %v33, 7
    %v35 = vsub.s32 0, %v34
    %v36 = vrot.slane %v31, %v35
    %v38 = vmul.f32 %v30, %v36
    %v39 = vld [vmem:[%s1] sm:$0x1]
    %v41 = vlaneseq
    %v42 = vshrl.u32 %v41, 7
    %v43 = vsub.s32 0, %v42
    %v44 = vrot.slane %v39, %v43
    %v46 = vadd.f32 %v38, %v44
    %v47 = vand.u32 2147483647, %v46
    %vm48 = vcmp.le.f32.partialorder %v47, 0.7853982
    %vm49 = vcmp.lt.s32.totalorder %v46, 0
    %v50 = vand.u32 %v46, 2139095040
    %v51 = vshrl.u32 %v50, 23
    %v52 = vsub.s32 %v51, 127
    %v53 = vand.u32 2147483647, %v46
    %v54 = vand.u32 %v53, 8388607
    %v55 = vor.u32 %v54, 8388608
    %v56 = vsub.s32 0, %v55
    %v57 = vadd.s32 %v52, 1
    %vm58 = vcmp.gt.s32.totalorder %v57, 0
    %v59 = vsel %vm58, %v57, 0
    %v60 = vshrl.u32 %v59, 5
    %v61 = vand.u32 %v59, 31
    %v62 = vsub.s32 32, %v61
    %v63 = vshrl.u32 683565275, %v62
    %v64 = vshll.u32 683565275, %v61
    %v65 = vshrl.u32 2475754826, %v62
    %v66 = vor.u32 %v64, %v65
    %v67 = vshll.u32 2475754826, %v61
    %v68 = vshrl.u32 2131351028, %v62
    %v69 = vor.u32 %v67, %v68
    %v70 = vshll.u32 2131351028, %v61
    %v71 = vshrl.u32 2102212464, %v62
    %v72 = vor.u32 %v70, %v71
    %v73 = vshll.u32 2102212464, %v61
    %v74 = vshrl.u32 920167782, %v62
    %v75 = vor.u32 %v73, %v74
    %v76 = vshll.u32 920167782, %v61
    %v77 = vshrl.u32 1326507024, %v62
    %v78 = vor.u32 %v76, %v77
    %vm79 = vcmp.lt.s32.totalorder %v60, 1
    %vm80 = vcmp.lt.s32.totalorder %v60, 2
    %vm81 = vcmp.lt.s32.totalorder %v60, 3
    %vm82 = vcmp.lt.s32.totalorder %v60, 4
    %v83 = vsel %vm79, %v63, %v66
    %v84 = vsel %vm82, %v72, 2102212464
    %v85 = vsel %vm81, %v69, %v84
    %v86 = vsel %vm80, %v83, %v85
    %v87 = vsel %vm79, %v66, %v69
    %v88 = vsel %vm82, %v75, 920167782
    %v89 = vsel %vm81, %v72, %v88
    %v90 = vsel %vm80, %v87, %v89
    %v91 = vsel %vm79, %v69, %v72
    %v92 = vsel %vm82, %v78, 1326507024
    %v93 = vsel %vm81, %v75, %v92
    %v94 = vsel %vm80, %v91, %v93
    %v95 = vshll.u32 %v55, 8
    %v96 = vmul.u32.u64.compose %v95, %v94
    %v97 = vextract.low.u32 %v96
    %v98 = vextract.high.u32 %v96
    %v99 = vmul.u32.u64.compose %v95, %v90
    %v100 = vextract.low.u32 %v99
    %v101 = vextract.high.u32 %v99
    %v102 = vmul.u32 %v95, %v86
    %v103 = vadd.s32 %v98, %v100
    %vm104 = vc.u32 %v98, %v100
    %v105 = vadd.s32 %v101, 1
    %v106 = vsel %vm104, %v105, %v101
    %v107 = vadd.s32 %v102, %v106
    %v108 = vadd.s32 %v107, 536870912
    %v109 = vshrl.u32 %v108, 30
    %v110 = vshll.u32 %v109, 30
    %v111 = vsub.s32 %v107, %v110
    %vm112 = vcmp.lt.s32.totalorder %v111, 0
    %v113 = vsub.s32 0, %v111
    %v114 = vsel %vm112, %v113, %v111
    %v115 = vclz %v114
    %v116 = vsub.s32 %v115, 2
    %vm117 = vcmp.gt.s32.totalorder 0, %v116
    %v118 = vsel %vm117, 0, %v116
    %v119 = vsub.s32 32, %v118
    %v120 = vshll.u32 %v111, %v118
    %v121 = vshrl.u32 %v103, %v119
    %v122 = vor.u32 %v120, %v121
    %v123 = vsub.s32 4294967266, %v118
    %v124 = vadd.s32 %v123, 127
    %v125 = vshll.u32 %v124, 23
    %v126 = vor.u32 4788187, %v125
    %v127 = vand.u32 2147483647, %v126
    %v129 = vcvt.s32.f32 %v122
    %v130 = vmul.f32 %v129, %v127
    %v131 = vxor.u32 %v130, 2147483648
    %v132 = vsel %vm49, %v131, %v130
    %v133 = vsub.s32 4, %v109
    %v134 = vsel %vm49, %v133, %v109
    %v135 = vsel %vm48, %v46, %v132
    %v136 = vsel %vm48, 0, %v134
    %v137 = vcosq.f32.pop %v135
    %v138 = vsinq.f32.pop %v135
    %vm139 = vweird.f32 %v46
    %v140 = vand.u32 %v136, 3
    %vm141 = vcmp.lt.s32.totalorder %v140, 2
    %vm142 = vcmp.eq.s32.totalorder %v140, 0
    %v143 = vxor.u32 %v138, 2147483648
    %v144 = vsel %vm142, %v137, %v143
    %vm145 = vcmp.eq.s32.totalorder %v140, 2
    %v146 = vxor.u32 %v137, 2147483648
    %v147 = vsel %vm145, %v146, %v138
    %v148 = vsel %vm141, %v144, %v147
    %v149 = vsel %vm139, nan, %v148
    %150 = vst [vmem:[#allocation5] sm:$0xff] %v149
    // Predicated region
    $region14: #{_rope_table_seq.1} parent=1 // pred_check
      _
    $region15: #{_rope_table_seq.1} parent=1 // pred_check_branch
      %152 = sbr.rel (0) target = $region17
    $region16: #{_rope_table_seq.1} parent=1 // pred_region
      %s154 = ssub.s32 128, 128
      %155 = vsyncadd [#allocation4], %s154
      %s157 = sshll.u32 [#allocation5], 4
      %s158 = int_to_ptr.vmem [resolvable:$true] %s157
      %160 = dma.vmem_to_hbm [thread:$0]  %s158, 128, %s2, [#allocation4]
    $region17: #{_rope_table_seq.1} parent=1 // pred_fallthru
      _
    // Predicated region
    $region18: #{_rope_table_seq.1} parent=1 // pred_check
      _
    $region19: #{_rope_table_seq.1} parent=1 // pred_check_branch
      %162 = sbr.rel (0) target = $region21
    $region20: #{_rope_table_seq.1} parent=1 // pred_region
      %163 = dma.done [#allocation4], 128
    $region21: #{_rope_table_seq.1} parent=1 // pred_fallthru
      _
    %164 = vsyncpa [#allocation3], 1
    %165 = vsyncpa [#allocation4], 1

</llo_original>
